<compile_context>
chip_gen: v6e
topology: v6e:2x2x1
jax: 0.10.0
libtpu: 0.0.40
codegen_flags: <defaults>
</compile_context>

<pallas_src>
import functools

import jax
import jax.numpy as jnp
from jax.experimental import pallas as pl
from jax.experimental.pallas import tpu as pltpu


def conv2d_prelu_kernel(x_ref, w_ref, b_ref, alpha_ref, o_ref):
    # x_ref:     (K, N*S)    bf16 im2col patches, whole batch folded into lanes
    # w_ref:     (Cout, K)   bf16 flattened conv weights
    # b_ref:     (Cout, 1)   f32 bias (broadcasts along the lane/spatial axis)
    # alpha_ref: (1, 1) SMEM f32 shared PReLU slope (nn.PReLU() default)
    # o_ref:     (Cout, N*S) f32 lane-dense output
    acc = jnp.dot(w_ref[...], x_ref[...], preferred_element_type=jnp.float32)
    acc = acc + b_ref[...]
    alpha = alpha_ref[0, 0]
    o_ref[...] = jnp.where(acc >= 0, acc, alpha * acc).astype(o_ref.dtype)


@functools.partial(jax.jit, static_argnames=("padding",))
def conv2d_prelu(x_nchw, weight_oihw, bias, alpha, padding):
    """Conv2d(stride=1, padding=padding, bias=True) + PReLU, matching PyTorch."""
    # TODO(synk): this im2col path assumes stride=1 / dilation=1 (the FSRCNN config).
    N, Cin, H, W = x_nchw.shape
    Cout, _, KH, KW = weight_oihw.shape

    x_pad = jnp.pad(
        x_nchw, ((0, 0), (0, 0), (padding, padding), (padding, padding)))
    Hp, Wp = H + 2 * padding, W + 2 * padding
    Ho, Wo = Hp - KH + 1, Wp - KW + 1          # stride == 1
    S = Ho * Wo
    NS = N * S
    K = Cin * KH * KW

    # im2col (fused by jit, never materialized eagerly):
    #   patches[i*KH*KW + kh*KW + kw, n*S + h*Wo + w] = x_pad[n, i, h+kh, w+kw]
    # K ordering matches weight_oihw.reshape(Cout, K) exactly.
    cols = []
    for kh in range(KH):
        for kw in range(KW):
            cols.append(x_pad[:, :, kh:kh + Ho, kw:kw + Wo])   # (N, Cin, Ho, Wo)
    patches = jnp.stack(cols, axis=0)                          # (KH*KW, N, Cin, Ho, Wo)
    patches = patches.transpose(2, 0, 1, 3, 4)                 # (Cin, KH*KW, N, Ho, Wo)
    patches = patches.reshape(K, NS).astype(jnp.bfloat16)      # bf16 MXU input

    w2 = weight_oihw.reshape(Cout, K).astype(jnp.bfloat16)     # one 2D weight tile
    b2 = bias.reshape(Cout, 1).astype(jnp.float32)             # lane-broadcast bias
    alpha2 = jnp.asarray(alpha, jnp.float32).reshape(1, 1)     # shared PReLU slope
    # TODO(synk): if the module ever uses nn.PReLU(num_parameters=Cout), pass a
    # (Cout, 1) slope column instead of the shared scalar.

    cost = pl.CostEstimate(
        flops=2 * Cout * K * NS,
        transcendentals=0,
        bytes_accessed=K * NS * 2 + Cout * K * 2 + Cout * 4 + Cout * NS * 4,
    )

    out = pl.pallas_call(
        conv2d_prelu_kernel,
        out_shape=jax.ShapeDtypeStruct((Cout, NS), jnp.float32),
        in_specs=[
            pl.BlockSpec(memory_space=pltpu.MemorySpace.VMEM),   # patches
            pl.BlockSpec(memory_space=pltpu.MemorySpace.VMEM),   # weights
            pl.BlockSpec(memory_space=pltpu.MemorySpace.VMEM),   # bias
            pl.BlockSpec(memory_space=pltpu.MemorySpace.SMEM),   # PReLU slope
        ],
        out_specs=pl.BlockSpec(memory_space=pltpu.MemorySpace.VMEM),
        cost_estimate=cost,
    )(patches, w2, b2, alpha2)

    # (Cout, N*S) -> (Cout, N, Ho, Wo) -> NCHW.  Layout glue, fused under jit.
    return out.reshape(Cout, N, Ho, Wo).transpose(1, 0, 2, 3).astype(x_nchw.dtype)


if __name__ == "__main__":
    # Module config: Conv2d(in=4, out=8, kernel=3, stride=1, padding=1, bias=True, act='PReLU')
    N, Cin, H, W = 2, 4, 16, 16
    Cout, Ksz, PAD = 8, 3, 1

    key = jax.random.PRNGKey(0)
    kx, kw, kb = jax.random.split(key, 3)
    x = jax.random.normal(kx, (N, Cin, H, W), jnp.float32)
    weight = jax.random.normal(kw, (Cout, Cin, Ksz, Ksz), jnp.float32) * 0.1
    bias = jax.random.normal(kb, (Cout,), jnp.float32) * 0.1
    alpha = 0.25  # nn.PReLU() default init

    out = conv2d_prelu(x, weight, bias, alpha, PAD)
    out = jax.block_until_ready(out)

    # Reference check with XLA conv (not part of the kernel path), f32 everywhere.
    ref = jax.lax.conv_general_dilated(
        x, weight, window_strides=(1, 1), padding=[(PAD, PAD), (PAD, PAD)],
        dimension_numbers=("NCHW", "OIHW", "NCHW"))
    ref = ref + bias.reshape(1, Cout, 1, 1)
    ref = jnp.where(ref >= 0, ref, alpha * ref)
    assert out.shape == (N, Cout, H, W)
    # bf16 MXU inputs with a 36-deep contraction -> relaxed tolerance.
    assert jnp.allclose(out, ref, atol=2e-2, rtol=2e-2)

    print("KERNEL_OK")
</pallas_src>

<mosaic_0001>
module attributes {stable_mosaic.version = 11 : i64} {
  func.func @conv2d_prelu_kernel(%arg0: memref<36x512xbf16, #tpu.memory_space<vmem>>, %arg1: memref<8x36xbf16, #tpu.memory_space<vmem>>, %arg2: memref<8x1xf32, #tpu.memory_space<vmem>>, %arg3: memref<1x1xf32, #tpu.memory_space<smem>>, %arg4: memref<8x512xf32, #tpu.memory_space<vmem>>) attributes {dimension_semantics = [], scalar_prefetch = 0 : i64, scratch_operands = 0 : i64, tpu.core_type = #tpu.core_type<tc>} {
    %c0 = arith.constant 0 : index
    %c0_0 = arith.constant 0 : index
    %0 = vector.load %arg1[%c0, %c0_0] : memref<8x36xbf16, #tpu.memory_space<vmem>>, vector<8x36xbf16>
    %c0_1 = arith.constant 0 : index
    %c0_2 = arith.constant 0 : index
    %1 = vector.load %arg0[%c0_1, %c0_2] : memref<36x512xbf16, #tpu.memory_space<vmem>>, vector<36x512xbf16>
    %cst = arith.constant dense<0.000000e+00> : vector<8x512xf32>
    %2 = tpu.matmul %0, %1, %cst {dimension_numbers = #tpu.dot_dimension_numbers<[1], [0], [0], [1], [0, 0, 1, 1], [], []>} : vector<8x36xbf16>, vector<36x512xbf16>, vector<8x512xf32> -> vector<8x512xf32>
    %c0_3 = arith.constant 0 : index
    %c0_4 = arith.constant 0 : index
    %3 = vector.load %arg2[%c0_3, %c0_4] : memref<8x1xf32, #tpu.memory_space<vmem>>, vector<8x1xf32>
    %4 = vector.broadcast %3 : vector<8x1xf32> to vector<8x512xf32>
    %5 = arith.addf %2, %4 : vector<8x512xf32>
    %c0_5 = arith.constant 0 : index
    %c0_6 = arith.constant 0 : index
    %6 = memref.load %arg3[%c0_5, %c0_6] : memref<1x1xf32, #tpu.memory_space<smem>>
    %cst_7 = arith.constant 0.000000e+00 : f32
    %7 = vector.broadcast %cst_7 : f32 to vector<8x512xf32>
    %8 = arith.cmpf oge, %5, %7 : vector<8x512xf32>
    %9 = vector.broadcast %6 : f32 to vector<8x512xf32>
    %10 = arith.mulf %9, %5 : vector<8x512xf32>
    %11 = arith.select %8, %5, %10 : vector<8x512xi1>, vector<8x512xf32>
    %c0_8 = arith.constant 0 : index
    %c0_9 = arith.constant 0 : index
    %12 = vector.load %arg4[%c0_8, %c0_9] : memref<8x512xf32, #tpu.memory_space<vmem>>, vector<8x512xf32>
    tpu.vector_store %arg4[%c0_8, %c0_9], %11 {strides = array<i32>} : memref<8x512xf32, #tpu.memory_space<vmem>>, vector<8x512xf32>,
    return
  }
}

</mosaic_0001>

<llo_original>
// kernel: conv2d_prelu.1
$region0: #{conv2d_prelu.1}
  #allocation0 [shape = 'u32[]', space=smem, size = 0x4, offset = 0x4, fixed_abs, tag = 'smem constant byte address 0x4 - core index']
  #allocation1 [shape = 'u32[144,128]{1,0:T(1,128)}', space=vmem, size = 0x12000, scoped, tag = 'internal scratch']
  #allocation2 [shape = 'f32[1,1]{1,0:T(1,128)S(6)}', space=smem, size = 0x200, scoped, tag = 'scoped memory for conv2d_prelu.1']
  %s0 = inlined_call_operand.vmem [shape: bf16[36,512], index: 0, kind: input, shape index: {}]
  %s1 = inlined_call_operand.vmem [shape: bf16[8,36], index: 1, kind: input, shape index: {}]
  %s2 = inlined_call_operand.vmem [shape: f32[8,1], index: 2, kind: input, shape index: {}]
  %s3 = inlined_call_operand.<no memory space> [shape: f32[1,1], index: 3, kind: input, shape index: {}]
  %s4 = inlined_call_operand.vmem [shape: f32[8,512], index: 4, kind: output, shape index: {}]
  %s5 = sld [smem:[#allocation0]]
  $region26: #{conv2d_prelu.1} parent=0
    _
  %s7 = ssub.s32 1, %s5
  %s8 = scalar_select 0, %s7, %s5
  %9 = sst [smem:[#allocation2]] %s3
  // Predicated region
  $region2: #{conv2d_prelu.1} parent=0 // pred_check
    _
  $region3: #{conv2d_prelu.1} parent=0 // pred_check_branch
    %11 = sbr.rel (0) target = $region5
  $region4: #{conv2d_prelu.1} parent=0 // pred_region
    _
  $region5: #{conv2d_prelu.1} parent=0 // pred_fallthru
    _
  // Predicated region
  $region6: #{conv2d_prelu.1} parent=0 // pred_check
    _
  $region7: #{conv2d_prelu.1} parent=0 // pred_check_branch
    %13 = sbr.rel (0) target = $region9
  $region8: #{conv2d_prelu.1} parent=0 // pred_region
    _
  $region9: #{conv2d_prelu.1} parent=0 // pred_fallthru
    _
  // Predicated region
  $region10: #{conv2d_prelu.1} parent=0 // pred_check
    _
  $region11: #{conv2d_prelu.1} parent=0 // pred_check_branch
    %15 = sbr.rel (0) target = $region13
  $region12: #{conv2d_prelu.1} parent=0 // pred_region
    _
  $region13: #{conv2d_prelu.1} parent=0 // pred_fallthru
    _
  // Predicated region
  $region14: #{conv2d_prelu.1} parent=0 // pred_check
    _
  $region15: #{conv2d_prelu.1} parent=0 // pred_check_branch
    %17 = sbr.rel (0) target = $region17
  $region16: #{conv2d_prelu.1} parent=0 // pred_region
    _
  $region17: #{conv2d_prelu.1} parent=0 // pred_fallthru
    _
  %v19 = vld [vmem:[%s1] sm:$0xf]
  %v20 = vld [vmem:[%s0] sm:$0xff]
  %v21 = vld [vmem:[%s0 + $0x8] sm:$0xff]
  %v22 = vld [vmem:[%s0 + $0x10] sm:$0xff]
  %v23 = vld [vmem:[%s0 + $0x18] sm:$0xff]
  %v24 = vld [vmem:[%s0 + $0x20] sm:$0xff]
  %v25 = vld [vmem:[%s0 + $0x28] sm:$0xff]
  %v26 = vld [vmem:[%s0 + $0x30] sm:$0xff]
  %v27 = vld [vmem:[%s0 + $0x38] sm:$0xff]
  %v28 = vld [vmem:[%s0 + $0x40] sm:$0x33]
  %v29 = vld [vmem:[%s0 + $0x48] sm:$0x33]
  %v30 = vld [vmem:[%s2] sm:$0xff]
  %32 = vset.pattern.permute.xlu0 0
  %33 = vperm.xlu0 %32, %v30
  %v34 = vpop.permute.xlu0 %33
  %v46 = vunpack.c.l.b16 %v20
  %v47 = vunpack.c.h.b16 %v20
  %v48 = vunpack.c.l.b16 %v21
  %v49 = vunpack.c.h.b16 %v21
  %v50 = vunpack.c.l.b16 %v22
  %v51 = vunpack.c.h.b16 %v22
  %v52 = vunpack.c.l.b16 %v23
  %v53 = vunpack.c.h.b16 %v23
  %v54 = vunpack.c.l.b16 %v24
  %v55 = vunpack.c.h.b16 %v24
  %v56 = vunpack.c.l.b16 %v25
  %v57 = vunpack.c.h.b16 %v25
  %v58 = vunpack.c.l.b16 %v26
  %v59 = vunpack.c.h.b16 %v26
  %v60 = vunpack.c.l.b16 %v27
  %v61 = vunpack.c.h.b16 %v27
  %v62 = vunpack.c.l.b16 %v28
  %v63 = vunpack.c.h.b16 %v28
  %v64 = vunpack.c.l.b16 %v29
  %v65 = vunpack.c.h.b16 %v29
  %v66 = vpack.c.b16 %v50, %v46
  %v67 = vpack.c.b16 %v51, %v47
  %v68 = vpack.c.b16 %v52, %v48
  %v69 = vpack.c.b16 %v53, %v49
  %v70 = vpack.c.b16 %v58, %v54
  %v71 = vpack.c.b16 %v59, %v55
  %v72 = vpack.c.b16 %v60, %v56
  %v73 = vpack.c.b16 %v61, %v57
  %v74 = vpack.c.b16 %v62, %v62
  %v75 = vpack.c.b16 %v63, %v63
  %v76 = vpack.c.b16 %v64, %v64
  %v77 = vpack.c.b16 %v65, %v65
  %vm86 = vcmask 293888
  %v88 = vsel %vm86, %v19, 0
  %vm90 = vcmask 1041408
  %v92 = vsel %vm90, %v74, 0
  %v95 = vsel %vm90, %v75, 0
  %v98 = vsel %vm90, %v76, 0
  %v101 = vsel %vm90, %v77, 0
  %103 = vmatprep.subr.bf16.mxu0 0
  %104 = vmatpush1.bf16.msra.mxu0 0
  %105 = vmatprep.subr.bf16.mxu0 0
  %106 = vmatpush1.bf16.msra.mxu0 0
  %107 = vmatprep.subr.bf16.mxu0 0
  %108 = vmatpush1.bf16.msra.mxu0 0
  %109 = vmatprep.subr.bf16.mxu0 0
  %110 = vmatpush1.bf16.msra.mxu0 0
  %111 = vmatprep.subr.bf16.mxu0 0
  %112 = vmatpush1.bf16.msra.mxu0 0
  %113 = vmatprep.subr.bf16.mxu0 %v95
  %114 = vmatpush1.bf16.msra.mxu0 %v92
  %115 = vmatprep.subr.bf16.mxu0 %v71
  %116 = vmatpush1.bf16.msra.mxu0 %v70
  %117 = vmatprep.subr.bf16.mxu0 %v67
  %118 = vmatpush1.bf16.msra.mxu0 %v66
  %119 = vmatprep.subr.bf16.mxu0 0
  %120 = vmatpush2.bf16.msra.mxu0 0
  %121 = vmatprep.subr.bf16.mxu0 0
  %122 = vmatpush2.bf16.msra.mxu0 0
  %123 = vmatprep.subr.bf16.mxu0 0
  %124 = vmatpush2.bf16.msra.mxu0 0
  %125 = vmatprep.subr.bf16.mxu0 0
  %126 = vmatpush2.bf16.msra.mxu0 0
  %127 = vmatprep.subr.bf16.mxu0 0
  %128 = vmatpush2.bf16.msra.mxu0 0
  %129 = vmatprep.subr.bf16.mxu0 0
  %130 = vmatpush2.bf16.msra.mxu0 0
  %131 = vmatprep.subr.bf16.mxu0 0
  %132 = vmatpush2.bf16.msra.mxu0 0
  %133 = vmatprep.subr.bf16.mxu0 0
  %134 = vmatpush2.bf16.msra.mxu0 0
  %135 = vmatprep.mubr.bf16.mxu0 0
  %136 = vmatmul.mubr.bf16.gmra.mxu0 %v88
  %v137 = vpop.f32.mrf.mxu0
  %v138 = vadd.f32 %v34, %v137
  %v139 = vpop.f32.mrf.mxu0
  %v140 = vadd.f32 %v34, %v139
  %v141 = vpop.f32.mrf.mxu0
  %v142 = vpop.f32.mrf.mxu0
  %143 = vdwg.mxu0
  %144 = vmatprep.subr.bf16.mxu0 0
  %145 = vmatpush1.bf16.msra.mxu0 0
  %146 = vmatprep.subr.bf16.mxu0 0
  %147 = vmatpush1.bf16.msra.mxu0 0
  %148 = vmatprep.subr.bf16.mxu0 0
  %149 = vmatpush1.bf16.msra.mxu0 0
  %150 = vmatprep.subr.bf16.mxu0 0
  %151 = vmatpush1.bf16.msra.mxu0 0
  %152 = vmatprep.subr.bf16.mxu0 0
  %153 = vmatpush1.bf16.msra.mxu0 0
  %154 = vmatprep.subr.bf16.mxu0 %v101
  %155 = vmatpush1.bf16.msra.mxu0 %v98
  %156 = vmatprep.subr.bf16.mxu0 %v73
  %157 = vmatpush1.bf16.msra.mxu0 %v72
  %158 = vmatprep.subr.bf16.mxu0 %v69
  %159 = vmatpush1.bf16.msra.mxu0 %v68
  %160 = vmatprep.subr.bf16.mxu0 0
  %161 = vmatpush2.bf16.msra.mxu0 0
  %162 = vmatprep.subr.bf16.mxu0 0
  %163 = vmatpush2.bf16.msra.mxu0 0
  %164 = vmatprep.subr.bf16.mxu0 0
  %165 = vmatpush2.bf16.msra.mxu0 0
  %166 = vmatprep.subr.bf16.mxu0 0
  %167 = vmatpush2.bf16.msra.mxu0 0
  %168 = vmatprep.subr.bf16.mxu0 0
  %169 = vmatpush2.bf16.msra.mxu0 0
  %170 = vmatprep.subr.bf16.mxu0 0
  %171 = vmatpush2.bf16.msra.mxu0 0
  %172 = vmatprep.subr.bf16.mxu0 0
  %173 = vmatpush2.bf16.msra.mxu0 0
  %174 = vmatprep.subr.bf16.mxu0 0
  %175 = vmatpush2.bf16.msra.mxu0 0
  %176 = vmatprep.mubr.bf16.mxu0 0
  %177 = vmatmul.mubr.bf16.gmra.mxu0 %v88
  %v178 = vpop.f32.mrf.mxu0
  %v179 = vadd.f32 %v34, %v178
  %v180 = vpop.f32.mrf.mxu0
  %v181 = vadd.f32 %v34, %v180
  %v182 = vpop.f32.mrf.mxu0
  %v183 = vpop.f32.mrf.mxu0
  %184 = vdwg.mxu0
  %s185 = sld [smem:[#allocation2]]
  %vm186 = vcmp.ge.f32.partialorder %v138, 0.0
  %vm187 = vcmp.ge.f32.partialorder %v140, 0.0
  %vm188 = vcmp.ge.f32.partialorder %v179, 0.0
  %vm189 = vcmp.ge.f32.partialorder %v181, 0.0
  %v190 = vstv %s185
  %v191 = vmul.f32 %v190, %v138
  %v192 = vmul.f32 %v190, %v140
  %v193 = vmul.f32 %v190, %v179
  %v194 = vmul.f32 %v190, %v181
  %v195 = vsel %vm186, %v138, %v191
  %v196 = vsel %vm187, %v140, %v192
  %v197 = vsel %vm188, %v179, %v193
  %v198 = vsel %vm189, %v181, %v194
  %199 = vst [vmem:[%s4] sm:$0xff] %v195
  %200 = vst [vmem:[%s4 + $0x8] sm:$0xff] %v196
  %201 = vst [vmem:[%s4 + $0x10] sm:$0xff] %v197
  %202 = vst [vmem:[%s4 + $0x18] sm:$0xff] %v198
  // Predicated region
  $region18: #{conv2d_prelu.1} parent=0 // pred_check
    _
  $region19: #{conv2d_prelu.1} parent=0 // pred_check_branch
    %204 = sbr.rel (0) target = $region21
  $region20: #{conv2d_prelu.1} parent=0 // pred_region
    _
  $region21: #{conv2d_prelu.1} parent=0 // pred_fallthru
    _
  // Predicated region
  $region22: #{conv2d_prelu.1} parent=0 // pred_check
    _
  $region23: #{conv2d_prelu.1} parent=0 // pred_check_branch
    %206 = sbr.rel (0) target = $region25
  $region24: #{conv2d_prelu.1} parent=0 // pred_region
    _
  $region25: #{conv2d_prelu.1} parent=0 // pred_fallthru
    _

</llo_original>
